<compile_context>
chip_gen: v7x
topology: tpu7x:2x2x1
jax: 0.10.0
libtpu: 0.0.40
codegen_flags: <defaults>
</compile_context>

<pallas_src>
import math
from functools import partial

import jax
import jax.numpy as jnp
from jax import lax
from jax.experimental import pallas as pl
from jax.experimental.pallas import tpu as pltpu

LANE = 128


# ----------------------------------------------------------------------------
# Pallas kernel: complex channel contraction, elementwise over modes.
#   out[o, b, m] = sum_i a[i, b, m] * w[i, o, m]   (complex)
# real/imag carried on the leading axis of each ref.
# ----------------------------------------------------------------------------
def _compl_mul_kernel(a_ref, w_ref, o_ref, *, tm_inner):
    # a_ref: (2, Cin,  TB,   TM)   [0] = real, [1] = imag
    # w_ref: (2, Cin,  Cout, TM)
    # o_ref: (2, Cout, TB,   TM)
    cin = a_ref.shape[1]
    tm = a_ref.shape[3]
    n_chunks = tm // tm_inner

    # Static chunk loop over the mode (lane) axis: each chunk's accumulators
    # die at the store, so chunk bodies are independent and static slices are
    # zero-cost Ref views.
    for c in range(n_chunks):
        lo = c * tm_inner
        sl = slice(lo, lo + tm_inner)

        def prod(i):
            # Per-i Ref loads: only the (TB, tmi) / (Cout, tmi) slices actually
            # needed are read (no whole-block value materialization).
            ar = a_ref[0, i, :, sl]                      # (TB,  tmi)
            ai = a_ref[1, i, :, sl]
            wr = w_ref[0, i, :, sl]                      # (Cout, tmi)
            wi = w_ref[1, i, :, sl]
            # 3-multiply (Karatsuba) complex product, accumulated as
            #   out[o, b, m] += a[b, m] * w[o, m]
            # with the batch axis on the sublanes of the big (Cout,TB,tmi) ops.
            t1 = (ar + ai)[None, :, :]                   # (1, TB,  tmi)
            t2 = (wi - wr)[:, None, :]                   # (Cout, 1, tmi)
            t3 = (wr + wi)[:, None, :]
            k1 = wr[:, None, :] * t1                     # (Cout, TB, tmi)
            k2 = ar[None, :, :] * t2
            k3 = ai[None, :, :] * t3
            return k1 - k3, k1 + k2                      # real, imag

        # Initialize accumulators from the i = 0 product (no zero-fill + add).
        acc_r, acc_i = prod(0)

        if cin > 1:
            def cin_body(i, accs):
                pr, pi = prod(i)
                return accs[0] + pr, accs[1] + pi

            acc_r, acc_i = lax.fori_loop(
                1, cin, cin_body, (acc_r, acc_i),
                unroll=True if cin <= 9 else 8)

        o_ref[0, :, :, sl] = acc_r
        o_ref[1, :, :, sl] = acc_i


def _vmem_capacity_bytes():
    """Best-effort per-core VMEM capacity; conservative (v7x-sized) fallback."""
    try:
        info = pltpu.get_tpu_info()
        cap = getattr(info, "vmem_capacity_bytes", None)
        if cap:
            return int(cap)
    except Exception:
        pass
    return 64 * 1024 * 1024


def _compl_mul2d_pallas(a_pack, w_pack):
    """a_pack: (2, Cin, B, M) f32, w_pack: (2, Cin, Cout, M) f32
       -> (2, Cout, B, M) f32 with out[o,b,m] = sum_i a[i,b,m]*w[i,o,m] (complex)."""
    _, Cin, B, M = a_pack.shape
    Cout = w_pack.shape[2]

    mp128 = pl.cdiv(M, LANE) * LANE

    # ---- generation-gated VMEM budget ---------------------------------------
    vmem_cap = _vmem_capacity_bytes()
    if vmem_cap >= 100 * 1024 * 1024:        # v5e / v6e: 128 MiB VMEM
        budget = 48 * 1024 * 1024
        vmem_limit = 100 * 1024 * 1024
    else:                                    # v7x: 64 MiB per TensorCore
        budget = 24 * 1024 * 1024
        vmem_limit = 48 * 1024 * 1024

    def blk_bytes(tb_, tm_):
        # one set of (a + w + out) blocks, f32, real+imag packed
        return 4 * 2 * tm_ * (Cin * tb_ + Cin * Cout + Cout * tb_)

    # ---- batch tile: multiple of 8 dividing B (sublane-dense), else whole B --
    tb_cands = [t for t in (32, 24, 16, 8) if t <= B and B % t == 0] or [B]
    base_tm = min(512, mp128)
    tb = next((t for t in tb_cands if 2 * blk_bytes(t, base_tm) <= budget),
              tb_cands[-1])

    # ---- lane tile: largest candidate whose double-buffered blocks fit -------
    tm = LANE
    for cand in (2048, 1024, 512, 256, 128):
        if cand <= mp128 and 2 * blk_bytes(tb, cand) <= budget:
            tm = cand
            break

    n_b = B // tb
    n_m = pl.cdiv(M, tm)

    # v7x has 2 TensorCores: if the grid would have a single block, split the
    # mode axis (keeps full (8,128) tiles and a per-core-resident weight block)
    # instead of shrinking the batch tile.
    if n_m * n_b < 2:
        for cand in (1024, 512, 256, 128):
            if cand < tm and pl.cdiv(M, cand) >= 2:
                tm = cand
                break
        n_m = pl.cdiv(M, tm)

    Mp = n_m * tm

    # ---- inner mode-chunk: keep the (Cout, tb, tm_inner) f32 accumulators ----
    # small enough to stay (mostly) in the 64x4KiB vreg file.
    acc_budget = 128 * 1024
    tm_inner = LANE
    for cand in (512, 256, 128):
        if cand <= tm and tm % cand == 0 and 2 * 4 * Cout * tb * cand <= acc_budget:
            tm_inner = cand
            break

    # ---- pad the mode axis (single pad thanks to packed real/imag) -----------
    pad = Mp - M
    if pad:
        a_pack = jnp.pad(a_pack, ((0, 0), (0, 0), (0, 0), (0, pad)))
        w_pack = jnp.pad(w_pack, ((0, 0), (0, 0), (0, 0), (0, pad)))

    # Grid = (mode tiles, batch tiles); batch is the inner (fastest) axis so
    # the weight block index stays constant across it (weights stay resident).
    a_spec = pl.BlockSpec((2, Cin, tb, tm), lambda m, b: (0, 0, b, m))
    w_spec = pl.BlockSpec((2, Cin, Cout, tm), lambda m, b: (0, 0, 0, m))
    o_spec = pl.BlockSpec((2, Cout, tb, tm), lambda m, b: (0, 0, b, m))

    flops = 8 * B * Cin * Cout * M                        # complex MACs
    bytes_accessed = 8 * M * (B * Cin + Cin * Cout + B * Cout)

    out = pl.pallas_call(
        partial(_compl_mul_kernel, tm_inner=tm_inner),
        out_shape=jax.ShapeDtypeStruct((2, Cout, B, Mp), jnp.float32),
        grid_spec=pltpu.PrefetchScalarGridSpec(
            num_scalar_prefetch=0,
            grid=(n_m, n_b),
            in_specs=[a_spec, w_spec],
            out_specs=o_spec,
        ),
        compiler_params=pltpu.CompilerParams(
            dimension_semantics=("parallel", "parallel"),
            vmem_limit_bytes=vmem_limit,
        ),
        cost_estimate=pl.CostEstimate(
            flops=flops, transcendentals=0, bytes_accessed=bytes_accessed),
    )(a_pack, w_pack)

    return out[:, :, :, :M]


# ----------------------------------------------------------------------------
# SpectralConv2d forward (matches the PyTorch module: only the [:mh, :mw]
# corner of the rFFT spectrum is transformed).
# ----------------------------------------------------------------------------
def spectral_conv2d(x, weight, modes_h, modes_w):
    """
    x      : (B, C_in, H, W)  float32   (NCHW, same as PyTorch)
    weight : (C_in, C_out, modes_h, modes_w, 2) float32
    returns: (B, C_out, H, W) float32
    """
    B, C_in, H, W = x.shape
    C_out = weight.shape[1]

    x_ft = jnp.fft.rfft2(x, norm="ortho")               # (B, Cin, H, W//2+1)

    mh = min(modes_h, H)
    mw = min(modes_w, W // 2 + 1)
    M = mh * mw

    a = x_ft[:, :, :mh, :mw]                             # (B, Cin, mh, mw)
    w_cplx = (weight[..., 0] + 1j * weight[..., 1])[:, :, :mh, :mw]

    # Pack real/imag and reorder so the batch axis sits second-to-last in the
    # big per-mode tiles (sublane-dense even when Cin/Cout < 8).
    a_pack = jnp.stack([jnp.real(a), jnp.imag(a)])       # (2, B, Cin, mh, mw)
    a_pack = a_pack.reshape(2, B, C_in, M).transpose(0, 2, 1, 3) \
                   .astype(jnp.float32)                  # (2, Cin, B, M)
    w_pack = jnp.stack([jnp.real(w_cplx), jnp.imag(w_cplx)]) \
                .reshape(2, C_in, C_out, M).astype(jnp.float32)

    out_pack = _compl_mul2d_pallas(a_pack, w_pack)       # (2, Cout, B, M)

    out_modes = (out_pack[0] + 1j * out_pack[1]) \
        .transpose(1, 0, 2).reshape(B, C_out, mh, mw)

    out_ft = jnp.zeros((B, C_out, H, W // 2 + 1), dtype=jnp.complex64)
    out_ft = out_ft.at[:, :, :mh, :mw].set(out_modes)

    return jnp.fft.irfft2(out_ft, s=(H, W), norm="ortho").astype(jnp.float32)


# Pure-JAX reference (mirrors the PyTorch forward) for a correctness check.
def spectral_conv2d_ref(x, weight, modes_h, modes_w):
    B, C_in, H, W = x.shape
    C_out = weight.shape[1]
    x_ft = jnp.fft.rfft2(x, norm="ortho")
    mh = min(modes_h, H)
    mw = min(modes_w, W // 2 + 1)
    w_cplx = (weight[..., 0] + 1j * weight[..., 1])[:, :, :mh, :mw]
    out_ft = jnp.zeros((B, C_out, H, W // 2 + 1), dtype=jnp.complex64)
    out_ft = out_ft.at[:, :, :mh, :mw].set(
        jnp.einsum("bixy,ioxy->boxy", x_ft[:, :, :mh, :mw], w_cplx))
    return jnp.fft.irfft2(out_ft, s=(H, W), norm="ortho")


if __name__ == "__main__":
    # Module hyper-parameters (same defaults as the PyTorch class).
    c_in, c_out = 4, 4
    modes_h, modes_w = 8, 12

    # Small deterministic inputs / params.
    B, H, W = 2, 16, 16
    key = jax.random.PRNGKey(0)
    kx, kw = jax.random.split(key)
    x = jax.random.normal(kx, (B, c_in, H, W), dtype=jnp.float32)
    scale = 1.0 / math.sqrt(c_in * c_out)
    weight = scale * jax.random.normal(
        kw, (c_in, c_out, modes_h, modes_w, 2), dtype=jnp.float32)

    fwd = jax.jit(partial(spectral_conv2d, modes_h=modes_h, modes_w=modes_w))
    out = fwd(x, weight)
    out = jax.block_until_ready(out)

    ref = spectral_conv2d_ref(x, weight, modes_h, modes_w)
    assert out.shape == (B, c_out, H, W)
    assert jnp.allclose(out, ref, rtol=1e-4, atol=1e-4), "mismatch vs reference"

    print("KERNEL_OK")
</pallas_src>

<mosaic_0001>
module attributes {stable_mosaic.version = 11 : i64} {
  func.func @_compl_mul_kernel(%arg0: i32, %arg1: i32, %arg2: memref<2x4x2x128xf32, #tpu.memory_space<vmem>>, %arg3: memref<2x4x4x128xf32, #tpu.memory_space<vmem>>, %arg4: memref<2x4x2x128xf32, #tpu.memory_space<vmem>>) attributes {dimension_semantics = [#tpu.dimension_semantics<parallel>, #tpu.dimension_semantics<parallel>], iteration_bounds = array<i64: 1, 1>, scalar_prefetch = 0 : i64, scratch_operands = 0 : i64, tpu.core_type = #tpu.core_type<tc>, window_params = [{transform_indices = @transform_0, window_bounds = array<i64: 2, 4, 2, 128>}, {transform_indices = @transform_1, window_bounds = array<i64: 2, 4, 4, 128>}, {transform_indices = @transform_2, window_bounds = array<i64: 2, 4, 2, 128>}]} {
    %c0 = arith.constant 0 : index
    %c0_0 = arith.constant 0 : index
    %c0_1 = arith.constant 0 : index
    %c0_2 = arith.constant 0 : index
    %0 = vector.load %arg2[%c0, %c0_0, %c0_1, %c0_2] : memref<2x4x2x128xf32, #tpu.memory_space<vmem>>, vector<1x1x2x128xf32>
    %1 = vector.shape_cast %0 : vector<1x1x2x128xf32> to vector<2x128xf32>
    %c1 = arith.constant 1 : index
    %c0_3 = arith.constant 0 : index
    %c0_4 = arith.constant 0 : index
    %c0_5 = arith.constant 0 : index
    %2 = vector.load %arg2[%c1, %c0_3, %c0_4, %c0_5] : memref<2x4x2x128xf32, #tpu.memory_space<vmem>>, vector<1x1x2x128xf32>
    %3 = vector.shape_cast %2 : vector<1x1x2x128xf32> to vector<2x128xf32>
    %c0_6 = arith.constant 0 : index
    %c0_7 = arith.constant 0 : index
    %c0_8 = arith.constant 0 : index
    %c0_9 = arith.constant 0 : index
    %4 = vector.load %arg3[%c0_6, %c0_7, %c0_8, %c0_9] : memref<2x4x4x128xf32, #tpu.memory_space<vmem>>, vector<1x1x4x128xf32>
    %5 = vector.shape_cast %4 : vector<1x1x4x128xf32> to vector<4x128xf32>
    %c1_10 = arith.constant 1 : index
    %c0_11 = arith.constant 0 : index
    %c0_12 = arith.constant 0 : index
    %c0_13 = arith.constant 0 : index
    %6 = vector.load %arg3[%c1_10, %c0_11, %c0_12, %c0_13] : memref<2x4x4x128xf32, #tpu.memory_space<vmem>>, vector<1x1x4x128xf32>
    %7 = vector.shape_cast %6 : vector<1x1x4x128xf32> to vector<4x128xf32>
    %8 = arith.addf %1, %3 : vector<2x128xf32>
    %9 = vector.shape_cast %8 : vector<2x128xf32> to vector<1x2x128xf32>
    %10 = arith.subf %7, %5 : vector<4x128xf32>
    %11 = vector.shape_cast %10 : vector<4x128xf32> to vector<4x1x128xf32>
    %12 = arith.addf %5, %7 : vector<4x128xf32>
    %13 = vector.shape_cast %12 : vector<4x128xf32> to vector<4x1x128xf32>
    %14 = vector.shape_cast %5 : vector<4x128xf32> to vector<4x1x128xf32>
    %15 = vector.broadcast %14 : vector<4x1x128xf32> to vector<4x2x128xf32>
    %16 = vector.broadcast %9 : vector<1x2x128xf32> to vector<4x2x128xf32>
    %17 = arith.mulf %15, %16 : vector<4x2x128xf32>
    %18 = vector.shape_cast %1 : vector<2x128xf32> to vector<1x2x128xf32>
    %19 = vector.broadcast %18 : vector<1x2x128xf32> to vector<4x2x128xf32>
    %20 = vector.broadcast %11 : vector<4x1x128xf32> to vector<4x2x128xf32>
    %21 = arith.mulf %19, %20 : vector<4x2x128xf32>
    %22 = vector.shape_cast %3 : vector<2x128xf32> to vector<1x2x128xf32>
    %23 = vector.broadcast %22 : vector<1x2x128xf32> to vector<4x2x128xf32>
    %24 = vector.broadcast %13 : vector<4x1x128xf32> to vector<4x2x128xf32>
    %25 = arith.mulf %23, %24 : vector<4x2x128xf32>
    %26 = arith.subf %17, %25 : vector<4x2x128xf32>
    %27 = arith.addf %17, %21 : vector<4x2x128xf32>
    %c1_i32 = arith.constant 1 : i32
    %c0_14 = arith.constant 0 : index
    %28 = arith.index_cast %c1_i32 : i32 to index
    %c0_15 = arith.constant 0 : index
    %c0_16 = arith.constant 0 : index
    %29 = vector.load %arg2[%c0_14, %28, %c0_15, %c0_16] : memref<2x4x2x128xf32, #tpu.memory_space<vmem>>, vector<1x1x2x128xf32>
    %30 = vector.shape_cast %29 : vector<1x1x2x128xf32> to vector<2x128xf32>
    %c1_17 = arith.constant 1 : index
    %31 = arith.index_cast %c1_i32 : i32 to index
    %c0_18 = arith.constant 0 : index
    %c0_19 = arith.constant 0 : index
    %32 = vector.load %arg2[%c1_17, %31, %c0_18, %c0_19] : memref<2x4x2x128xf32, #tpu.memory_space<vmem>>, vector<1x1x2x128xf32>
    %33 = vector.shape_cast %32 : vector<1x1x2x128xf32> to vector<2x128xf32>
    %c0_20 = arith.constant 0 : index
    %34 = arith.index_cast %c1_i32 : i32 to index
    %c0_21 = arith.constant 0 : index
    %c0_22 = arith.constant 0 : index
    %35 = vector.load %arg3[%c0_20, %34, %c0_21, %c0_22] : memref<2x4x4x128xf32, #tpu.memory_space<vmem>>, vector<1x1x4x128xf32>
    %36 = vector.shape_cast %35 : vector<1x1x4x128xf32> to vector<4x128xf32>
    %c1_23 = arith.constant 1 : index
    %37 = arith.index_cast %c1_i32 : i32 to index
    %c0_24 = arith.constant 0 : index
    %c0_25 = arith.constant 0 : index
    %38 = vector.load %arg3[%c1_23, %37, %c0_24, %c0_25] : memref<2x4x4x128xf32, #tpu.memory_space<vmem>>, vector<1x1x4x128xf32>
    %39 = vector.shape_cast %38 : vector<1x1x4x128xf32> to vector<4x128xf32>
    %40 = arith.addf %30, %33 : vector<2x128xf32>
    %41 = vector.shape_cast %40 : vector<2x128xf32> to vector<1x2x128xf32>
    %42 = arith.subf %39, %36 : vector<4x128xf32>
    %43 = vector.shape_cast %42 : vector<4x128xf32> to vector<4x1x128xf32>
    %44 = arith.addf %36, %39 : vector<4x128xf32>
    %45 = vector.shape_cast %44 : vector<4x128xf32> to vector<4x1x128xf32>
    %46 = vector.shape_cast %36 : vector<4x128xf32> to vector<4x1x128xf32>
    %47 = vector.broadcast %46 : vector<4x1x128xf32> to vector<4x2x128xf32>
    %48 = vector.broadcast %41 : vector<1x2x128xf32> to vector<4x2x128xf32>
    %49 = arith.mulf %47, %48 : vector<4x2x128xf32>
    %50 = vector.shape_cast %30 : vector<2x128xf32> to vector<1x2x128xf32>
    %51 = vector.broadcast %50 : vector<1x2x128xf32> to vector<4x2x128xf32>
    %52 = vector.broadcast %43 : vector<4x1x128xf32> to vector<4x2x128xf32>
    %53 = arith.mulf %51, %52 : vector<4x2x128xf32>
    %54 = vector.shape_cast %33 : vector<2x128xf32> to vector<1x2x128xf32>
    %55 = vector.broadcast %54 : vector<1x2x128xf32> to vector<4x2x128xf32>
    %56 = vector.broadcast %45 : vector<4x1x128xf32> to vector<4x2x128xf32>
    %57 = arith.mulf %55, %56 : vector<4x2x128xf32>
    %58 = arith.subf %49, %57 : vector<4x2x128xf32>
    %59 = arith.addf %49, %53 : vector<4x2x128xf32>
    %60 = arith.addf %26, %58 : vector<4x2x128xf32>
    %61 = arith.addf %27, %59 : vector<4x2x128xf32>
    %c2_i32 = arith.constant 2 : i32
    %c0_26 = arith.constant 0 : index
    %62 = arith.index_cast %c2_i32 : i32 to index
    %c0_27 = arith.constant 0 : index
    %c0_28 = arith.constant 0 : index
    %63 = vector.load %arg2[%c0_26, %62, %c0_27, %c0_28] : memref<2x4x2x128xf32, #tpu.memory_space<vmem>>, vector<1x1x2x128xf32>
    %64 = vector.shape_cast %63 : vector<1x1x2x128xf32> to vector<2x128xf32>
    %c1_29 = arith.constant 1 : index
    %65 = arith.index_cast %c2_i32 : i32 to index
    %c0_30 = arith.constant 0 : index
    %c0_31 = arith.constant 0 : index
    %66 = vector.load %arg2[%c1_29, %65, %c0_30, %c0_31] : memref<2x4x2x128xf32, #tpu.memory_space<vmem>>, vector<1x1x2x128xf32>
    %67 = vector.shape_cast %66 : vector<1x1x2x128xf32> to vector<2x128xf32>
    %c0_32 = arith.constant 0 : index
    %68 = arith.index_cast %c2_i32 : i32 to index
    %c0_33 = arith.constant 0 : index
    %c0_34 = arith.constant 0 : index
    %69 = vector.load %arg3[%c0_32, %68, %c0_33, %c0_34] : memref<2x4x4x128xf32, #tpu.memory_space<vmem>>, vector<1x1x4x128xf32>
    %70 = vector.shape_cast %69 : vector<1x1x4x128xf32> to vector<4x128xf32>
    %c1_35 = arith.constant 1 : index
    %71 = arith.index_cast %c2_i32 : i32 to index
    %c0_36 = arith.constant 0 : index
    %c0_37 = arith.constant 0 : index
    %72 = vector.load %arg3[%c1_35, %71, %c0_36, %c0_37] : memref<2x4x4x128xf32, #tpu.memory_space<vmem>>, vector<1x1x4x128xf32>
    %73 = vector.shape_cast %72 : vector<1x1x4x128xf32> to vector<4x128xf32>
    %74 = arith.addf %64, %67 : vector<2x128xf32>
    %75 = vector.shape_cast %74 : vector<2x128xf32> to vector<1x2x128xf32>
    %76 = arith.subf %73, %70 : vector<4x128xf32>
    %77 = vector.shape_cast %76 : vector<4x128xf32> to vector<4x1x128xf32>
    %78 = arith.addf %70, %73 : vector<4x128xf32>
    %79 = vector.shape_cast %78 : vector<4x128xf32> to vector<4x1x128xf32>
    %80 = vector.shape_cast %70 : vector<4x128xf32> to vector<4x1x128xf32>
    %81 = vector.broadcast %80 : vector<4x1x128xf32> to vector<4x2x128xf32>
    %82 = vector.broadcast %75 : vector<1x2x128xf32> to vector<4x2x128xf32>
    %83 = arith.mulf %81, %82 : vector<4x2x128xf32>
    %84 = vector.shape_cast %64 : vector<2x128xf32> to vector<1x2x128xf32>
    %85 = vector.broadcast %84 : vector<1x2x128xf32> to vector<4x2x128xf32>
    %86 = vector.broadcast %77 : vector<4x1x128xf32> to vector<4x2x128xf32>
    %87 = arith.mulf %85, %86 : vector<4x2x128xf32>
    %88 = vector.shape_cast %67 : vector<2x128xf32> to vector<1x2x128xf32>
    %89 = vector.broadcast %88 : vector<1x2x128xf32> to vector<4x2x128xf32>
    %90 = vector.broadcast %79 : vector<4x1x128xf32> to vector<4x2x128xf32>
    %91 = arith.mulf %89, %90 : vector<4x2x128xf32>
    %92 = arith.subf %83, %91 : vector<4x2x128xf32>
    %93 = arith.addf %83, %87 : vector<4x2x128xf32>
    %94 = arith.addf %60, %92 : vector<4x2x128xf32>
    %95 = arith.addf %61, %93 : vector<4x2x128xf32>
    %c3_i32 = arith.constant 3 : i32
    %c0_38 = arith.constant 0 : index
    %96 = arith.index_cast %c3_i32 : i32 to index
    %c0_39 = arith.constant 0 : index
    %c0_40 = arith.constant 0 : index
    %97 = vector.load %arg2[%c0_38, %96, %c0_39, %c0_40] : memref<2x4x2x128xf32, #tpu.memory_space<vmem>>, vector<1x1x2x128xf32>
    %98 = vector.shape_cast %97 : vector<1x1x2x128xf32> to vector<2x128xf32>
    %c1_41 = arith.constant 1 : index
    %99 = arith.index_cast %c3_i32 : i32 to index
    %c0_42 = arith.constant 0 : index
    %c0_43 = arith.constant 0 : index
    %100 = vector.load %arg2[%c1_41, %99, %c0_42, %c0_43] : memref<2x4x2x128xf32, #tpu.memory_space<vmem>>, vector<1x1x2x128xf32>
    %101 = vector.shape_cast %100 : vector<1x1x2x128xf32> to vector<2x128xf32>
    %c0_44 = arith.constant 0 : index
    %102 = arith.index_cast %c3_i32 : i32 to index
    %c0_45 = arith.constant 0 : index
    %c0_46 = arith.constant 0 : index
    %103 = vector.load %arg3[%c0_44, %102, %c0_45, %c0_46] : memref<2x4x4x128xf32, #tpu.memory_space<vmem>>, vector<1x1x4x128xf32>
    %104 = vector.shape_cast %103 : vector<1x1x4x128xf32> to vector<4x128xf32>
    %c1_47 = arith.constant 1 : index
    %105 = arith.index_cast %c3_i32 : i32 to index
    %c0_48 = arith.constant 0 : index
    %c0_49 = arith.constant 0 : index
    %106 = vector.load %arg3[%c1_47, %105, %c0_48, %c0_49] : memref<2x4x4x128xf32, #tpu.memory_space<vmem>>, vector<1x1x4x128xf32>
    %107 = vector.shape_cast %106 : vector<1x1x4x128xf32> to vector<4x128xf32>
    %108 = arith.addf %98, %101 : vector<2x128xf32>
    %109 = vector.shape_cast %108 : vector<2x128xf32> to vector<1x2x128xf32>
    %110 = arith.subf %107, %104 : vector<4x128xf32>
    %111 = vector.shape_cast %110 : vector<4x128xf32> to vector<4x1x128xf32>
    %112 = arith.addf %104, %107 : vector<4x128xf32>
    %113 = vector.shape_cast %112 : vector<4x128xf32> to vector<4x1x128xf32>
    %114 = vector.shape_cast %104 : vector<4x128xf32> to vector<4x1x128xf32>
    %115 = vector.broadcast %114 : vector<4x1x128xf32> to vector<4x2x128xf32>
    %116 = vector.broadcast %109 : vector<1x2x128xf32> to vector<4x2x128xf32>
    %117 = arith.mulf %115, %116 : vector<4x2x128xf32>
    %118 = vector.shape_cast %98 : vector<2x128xf32> to vector<1x2x128xf32>
    %119 = vector.broadcast %118 : vector<1x2x128xf32> to vector<4x2x128xf32>
    %120 = vector.broadcast %111 : vector<4x1x128xf32> to vector<4x2x128xf32>
    %121 = arith.mulf %119, %120 : vector<4x2x128xf32>
    %122 = vector.shape_cast %101 : vector<2x128xf32> to vector<1x2x128xf32>
    %123 = vector.broadcast %122 : vector<1x2x128xf32> to vector<4x2x128xf32>
    %124 = vector.broadcast %113 : vector<4x1x128xf32> to vector<4x2x128xf32>
    %125 = arith.mulf %123, %124 : vector<4x2x128xf32>
    %126 = arith.subf %117, %125 : vector<4x2x128xf32>
    %127 = arith.addf %117, %121 : vector<4x2x128xf32>
    %128 = arith.addf %94, %126 : vector<4x2x128xf32>
    %129 = arith.addf %95, %127 : vector<4x2x128xf32>
    %c3_i32_50 = arith.constant 3 : i32
    %c0_51 = arith.constant 0 : index
    %c0_52 = arith.constant 0 : index
    %c0_53 = arith.constant 0 : index
    %c0_54 = arith.constant 0 : index
    %130 = vector.load %arg4[%c0_51, %c0_52, %c0_53, %c0_54] : memref<2x4x2x128xf32, #tpu.memory_space<vmem>>, vector<1x4x2x128xf32>
    %131 = vector.shape_cast %130 : vector<1x4x2x128xf32> to vector<4x2x128xf32>
    %132 = vector.shape_cast %128 : vector<4x2x128xf32> to vector<1x4x2x128xf32>
    tpu.vector_store %arg4[%c0_51, %c0_52, %c0_53, %c0_54], %132 {strides = array<i32>} : memref<2x4x2x128xf32, #tpu.memory_space<vmem>>, vector<1x4x2x128xf32>,
    %c1_55 = arith.constant 1 : index
    %c0_56 = arith.constant 0 : index
    %c0_57 = arith.constant 0 : index
    %c0_58 = arith.constant 0 : index
    %133 = vector.load %arg4[%c1_55, %c0_56, %c0_57, %c0_58] : memref<2x4x2x128xf32, #tpu.memory_space<vmem>>, vector<1x4x2x128xf32>
    %134 = vector.shape_cast %133 : vector<1x4x2x128xf32> to vector<4x2x128xf32>
    %135 = vector.shape_cast %129 : vector<4x2x128xf32> to vector<1x4x2x128xf32>
    tpu.vector_store %arg4[%c1_55, %c0_56, %c0_57, %c0_58], %135 {strides = array<i32>} : memref<2x4x2x128xf32, #tpu.memory_space<vmem>>, vector<1x4x2x128xf32>,
    return
  }
  func.func @transform_0(%arg0: i32, %arg1: i32) -> (i32, i32, i32, i32) {
    %c0_i32 = arith.constant 0 : i32
    %c0_i32_0 = arith.constant 0 : i32
    %c0_i32_1 = arith.constant 0 : i32
    return %c0_i32, %c0_i32_0, %arg1, %arg0 : i32, i32, i32, i32
  }
  func.func @transform_1(%arg0: i32, %arg1: i32) -> (i32, i32, i32, i32) {
    %c0_i32 = arith.constant 0 : i32
    %c0_i32_0 = arith.constant 0 : i32
    %c0_i32_1 = arith.constant 0 : i32
    %c0_i32_2 = arith.constant 0 : i32
    return %c0_i32, %c0_i32_0, %c0_i32_1, %arg0 : i32, i32, i32, i32
  }
  func.func @transform_2(%arg0: i32, %arg1: i32) -> (i32, i32, i32, i32) {
    %c0_i32 = arith.constant 0 : i32
    %c0_i32_0 = arith.constant 0 : i32
    %c0_i32_1 = arith.constant 0 : i32
    return %c0_i32, %c0_i32_0, %arg1, %arg0 : i32, i32, i32, i32
  }
}

</mosaic_0001>

<llo_original>
// kernel: reverse.1
$region0: #{reverse.1}
  %s0 = inlined_call_operand.vmem [shape: f32[2,4,16,7], index: 0, kind: input, shape index: {}]
  %s1 = inlined_call_operand.vmem [shape: f32[2,4,16,7], index: 1, kind: output, shape index: {}]
  $region1: #{reverse.1} parent=0
    #allocation0 [shape = 'u8[65536]{0}', space=vmem, size = 0x10000, scoped, tag = 'operand span for operand 0']
    #allocation1 [shape = 'u8[32768]{0}', space=vmem, size = 0x8000, scoped, tag = 'operand span for operand 1']
    %s2 = scalar_lea.vmem [#allocation0], 8
    // Predicated region
    $region2: #{reverse.1} parent=1 // pred_check
      _
    $region3: #{reverse.1} parent=1 // pred_check_branch
      %4 = sbr.rel (0) target = $region5
    $region4: #{reverse.1} parent=1 // pred_region
      // Predicated region
      $region6: #{reverse.1} parent=4 // pred_check
        _
      $region7: #{reverse.1} parent=4 // pred_check_branch
        %6 = sbr.rel (0) target = $region9
      $region8: #{reverse.1} parent=4 // pred_region
        // Predicated region
        $region21: #{reverse.1} parent=8 // pred_check
          _
        $region22: #{reverse.1} parent=8 // pred_check_branch
          %35 = sbr.rel (0) target = $region24
        $region23: #{reverse.1} parent=8 // pred_region
          loop: start=0, step=1, limit=1
          $region25: #{reverse.1} parent=23 // loop_pre_header
            _
          $region26: #{reverse.1} parent=23 // loop_header
            %s37 = sphi 0, %s41
            %p38 = scmp.ge.s32.totalorder %s37, 1
            %s42 = sphi %s0, %s0
            %s43 = sphi %s2, %s2
          $region27: #{reverse.1} parent=23 // loop_header_branch
            %40 = sbr.rel (%p38) target = $region31
          $region28: #{reverse.1} parent=23 // loop_body
            %v44 = vld [vmem:[%s42] sm:$0xff]
            %45 = vst [vmem:[%s43] sm:$0xff] %v44
            %v46 = vld [vmem:[%s42 + $0x8] sm:$0xff]
            %47 = vst [vmem:[%s43 + $0x10] sm:$0xff] %v46
            %v48 = vld [vmem:[%s42 + $0x10] sm:$0xff]
            %49 = vst [vmem:[%s43 + $0x20] sm:$0xff] %v48
            %v50 = vld [vmem:[%s42 + $0x18] sm:$0xff]
            %51 = vst [vmem:[%s43 + $0x30] sm:$0xff] %v50
            %v52 = vld [vmem:[%s42 + $0x20] sm:$0xff]
            %53 = vst [vmem:[%s43 + $0x40] sm:$0xff] %v52
            %v54 = vld [vmem:[%s42 + $0x28] sm:$0xff]
            %55 = vst [vmem:[%s43 + $0x50] sm:$0xff] %v54
            %v56 = vld [vmem:[%s42 + $0x30] sm:$0xff]
            %57 = vst [vmem:[%s43 + $0x60] sm:$0xff] %v56
            %v58 = vld [vmem:[%s42 + $0x38] sm:$0xff]
            %59 = vst [vmem:[%s43 + $0x70] sm:$0xff] %v58
          $region29: #{reverse.1} parent=23 // loop_footer
            %s41 = sadd.s32 1, %s37
          $region30: #{reverse.1} parent=23 // loop_footer_branch
            %36 = sbr.rel target = $region26
          $region31: #{reverse.1} parent=23 // loop_exit
            _
        $region24: #{reverse.1} parent=8 // pred_fallthru
          _
        // Predicated region
        $region32: #{reverse.1} parent=8 // pred_check
          _
        $region33: #{reverse.1} parent=8 // pred_check_branch
          %61 = sbr.rel target = $region35
        $region34: #{reverse.1} parent=8 // pred_region
          _
        $region35: #{reverse.1} parent=8 // pred_fallthru
          _
      $region9: #{reverse.1} parent=4 // pred_fallthru
        _
      // Predicated region
      $region10: #{reverse.1} parent=4 // pred_check
        _
      $region11: #{reverse.1} parent=4 // pred_check_branch
        %8 = sbr.rel target = $region13
      $region12: #{reverse.1} parent=4 // pred_region
        loop: start=0, step=1, limit=1
        $region14: #{reverse.1} parent=12 // loop_pre_header
          _
        $region15: #{reverse.1} parent=12 // loop_header
          %s11 = sphi 0, %s15
          %p12 = scmp.ge.s32.totalorder %s11, 1
          %s16 = sphi %s0, %s0
          %s17 = sphi %s2, %s2
        $region16: #{reverse.1} parent=12 // loop_header_branch
          %14 = sbr.rel (%p12) target = $region20
        $region17: #{reverse.1} parent=12 // loop_body
          %v18 = vld [vmem:[%s16] sm:$0xff]
          %19 = vst [vmem:[%s17] sm:$0xff] %v18
          %v20 = vld [vmem:[%s16 + $0x8] sm:$0xff]
          %21 = vst [vmem:[%s17 + $0x10] sm:$0xff] %v20
          %v22 = vld [vmem:[%s16 + $0x10] sm:$0xff]
          %23 = vst [vmem:[%s17 + $0x20] sm:$0xff] %v22
          %v24 = vld [vmem:[%s16 + $0x18] sm:$0xff]
          %25 = vst [vmem:[%s17 + $0x30] sm:$0xff] %v24
          %v26 = vld [vmem:[%s16 + $0x20] sm:$0xff]
          %27 = vst [vmem:[%s17 + $0x40] sm:$0xff] %v26
          %v28 = vld [vmem:[%s16 + $0x28] sm:$0xff]
          %29 = vst [vmem:[%s17 + $0x50] sm:$0xff] %v28
          %v30 = vld [vmem:[%s16 + $0x30] sm:$0xff]
          %31 = vst [vmem:[%s17 + $0x60] sm:$0xff] %v30
          %v32 = vld [vmem:[%s16 + $0x38] sm:$0xff]
          %33 = vst [vmem:[%s17 + $0x70] sm:$0xff] %v32
        $region18: #{reverse.1} parent=12 // loop_footer
          %s15 = sadd.s32 1, %s11
        $region19: #{reverse.1} parent=12 // loop_footer_branch
          %10 = sbr.rel target = $region15
        $region20: #{reverse.1} parent=12 // loop_exit
          _
      $region13: #{reverse.1} parent=4 // pred_fallthru
        _
    $region5: #{reverse.1} parent=1 // pred_fallthru
      _
    %62 = vnop
    %s63 = scalar_lea.vmem [#allocation0], 7
    %v64 = vld [vmem:[%s63] ss:$-1 sm:$0xff]
    %v65 = vrot.slane %v64, 1
    %66 = vst [vmem:[#allocation1] sm:$0xff] %v65
    %s67 = scalar_lea.vmem [#allocation0], 8
    %s68 = scalar_lea.vmem %s67, 7 [#allocation0]
    %v69 = vld [vmem:[%s68] ss:$-1 sm:$0xff]
    %v70 = vrot.slane %v69, 1
    %v71 = vlaneseq
    %v72 = vshrl.u32 %v71, 7
    %vm73 = vcmp.lt.s32.totalorder %v72, 7
    %74 = vst.msk [vmem:[#allocation1] sm:$0xff] %vm73, %v70
    %s75 = scalar_lea.vmem [#allocation1], 8
    %s76 = scalar_lea.vmem [#allocation0], 16
    %s77 = scalar_lea.vmem %s76, 7 [#allocation0]
    %v78 = vld [vmem:[%s77] ss:$-1 sm:$0xff]
    %v79 = vrot.slane %v78, 1
    %80 = vst [vmem:[%s75] sm:$0xff] %v79
    %s81 = scalar_lea.vmem %s76, 8 [#allocation0]
    %s82 = scalar_lea.vmem %s81, 7 [#allocation0]
    %v83 = vld [vmem:[%s82] ss:$-1 sm:$0xff]
    %v84 = vrot.slane %v83, 1
    %v85 = vlaneseq
    %v86 = vshrl.u32 %v85, 7
    %vm87 = vcmp.lt.s32.totalorder %v86, 7
    %88 = vst.msk [vmem:[%s75] sm:$0xff] %vm87, %v84
    %s89 = scalar_lea.vmem [#allocation1], 16
    %s90 = scalar_lea.vmem [#allocation0], 32
    %s91 = scalar_lea.vmem %s90, 7 [#allocation0]
    %v92 = vld [vmem:[%s91] ss:$-1 sm:$0xff]
    %v93 = vrot.slane %v92, 1
    %94 = vst [vmem:[%s89] sm:$0xff] %v93
    %s95 = scalar_lea.vmem %s90, 8 [#allocation0]
    %s96 = scalar_lea.vmem %s95, 7 [#allocation0]
    %v97 = vld [vmem:[%s96] ss:$-1 sm:$0xff]
    %v98 = vrot.slane %v97, 1
    %v99 = vlaneseq
    %v100 = vshrl.u32 %v99, 7
    %vm101 = vcmp.lt.s32.totalorder %v100, 7
    %102 = vst.msk [vmem:[%s89] sm:$0xff] %vm101, %v98
    %s103 = scalar_lea.vmem [#allocation1], 24
    %s104 = scalar_lea.vmem [#allocation0], 48
    %s105 = scalar_lea.vmem %s104, 7 [#allocation0]
    %v106 = vld [vmem:[%s105] ss:$-1 sm:$0xff]
    %v107 = vrot.slane %v106, 1
    %108 = vst [vmem:[%s103] sm:$0xff] %v107
    %s109 = scalar_lea.vmem %s104, 8 [#allocation0]
    %s110 = scalar_lea.vmem %s109, 7 [#allocation0]
    %v111 = vld [vmem:[%s110] ss:$-1 sm:$0xff]
    %v112 = vrot.slane %v111, 1
    %v113 = vlaneseq
    %v114 = vshrl.u32 %v113, 7
    %vm115 = vcmp.lt.s32.totalorder %v114, 7
    %116 = vst.msk [vmem:[%s103] sm:$0xff] %vm115, %v112
    %s117 = scalar_lea.vmem [#allocation1], 32
    %s118 = scalar_lea.vmem [#allocation0], 64
    %s119 = scalar_lea.vmem %s118, 7 [#allocation0]
    %v120 = vld [vmem:[%s119] ss:$-1 sm:$0xff]
    %v121 = vrot.slane %v120, 1
    %122 = vst [vmem:[%s117] sm:$0xff] %v121
    %s123 = scalar_lea.vmem %s118, 8 [#allocation0]
    %s124 = scalar_lea.vmem %s123, 7 [#allocation0]
    %v125 = vld [vmem:[%s124] ss:$-1 sm:$0xff]
    %v126 = vrot.slane %v125, 1
    %v127 = vlaneseq
    %v128 = vshrl.u32 %v127, 7
    %vm129 = vcmp.lt.s32.totalorder %v128, 7
    %130 = vst.msk [vmem:[%s117] sm:$0xff] %vm129, %v126
    %s131 = scalar_lea.vmem [#allocation1], 40
    %s132 = scalar_lea.vmem [#allocation0], 80
    %s133 = scalar_lea.vmem %s132, 7 [#allocation0]
    %v134 = vld [vmem:[%s133] ss:$-1 sm:$0xff]
    %v135 = vrot.slane %v134, 1
    %136 = vst [vmem:[%s131] sm:$0xff] %v135
    %s137 = scalar_lea.vmem %s132, 8 [#allocation0]
    %s138 = scalar_lea.vmem %s137, 7 [#allocation0]
    %v139 = vld [vmem:[%s138] ss:$-1 sm:$0xff]
    %v140 = vrot.slane %v139, 1
    %v141 = vlaneseq
    %v142 = vshrl.u32 %v141, 7
    %vm143 = vcmp.lt.s32.totalorder %v142, 7
    %144 = vst.msk [vmem:[%s131] sm:$0xff] %vm143, %v140
    %s145 = scalar_lea.vmem [#allocation1], 48
    %s146 = scalar_lea.vmem [#allocation0], 96
    %s147 = scalar_lea.vmem %s146, 7 [#allocation0]
    %v148 = vld [vmem:[%s147] ss:$-1 sm:$0xff]
    %v149 = vrot.slane %v148, 1
    %150 = vst [vmem:[%s145] sm:$0xff] %v149
    %s151 = scalar_lea.vmem %s146, 8 [#allocation0]
    %s152 = scalar_lea.vmem %s151, 7 [#allocation0]
    %v153 = vld [vmem:[%s152] ss:$-1 sm:$0xff]
    %v154 = vrot.slane %v153, 1
    %v155 = vlaneseq
    %v156 = vshrl.u32 %v155, 7
    %vm157 = vcmp.lt.s32.totalorder %v156, 7
    %158 = vst.msk [vmem:[%s145] sm:$0xff] %vm157, %v154
    %s159 = scalar_lea.vmem [#allocation1], 56
    %s160 = scalar_lea.vmem [#allocation0], 112
    %s161 = scalar_lea.vmem %s160, 7 [#allocation0]
    %v162 = vld [vmem:[%s161] ss:$-1 sm:$0xff]
    %v163 = vrot.slane %v162, 1
    %164 = vst [vmem:[%s159] sm:$0xff] %v163
    %s165 = scalar_lea.vmem %s160, 8 [#allocation0]
    %s166 = scalar_lea.vmem %s165, 7 [#allocation0]
    %v167 = vld [vmem:[%s166] ss:$-1 sm:$0xff]
    %v168 = vrot.slane %v167, 1
    %v169 = vlaneseq
    %v170 = vshrl.u32 %v169, 7
    %vm171 = vcmp.lt.s32.totalorder %v170, 7
    %172 = vst.msk [vmem:[%s159] sm:$0xff] %vm171, %v168
    // Predicated region
    $region36: #{reverse.1} parent=1 // pred_check
      _
    $region37: #{reverse.1} parent=1 // pred_check_branch
      %174 = sbr.rel (0) target = $region39
    $region38: #{reverse.1} parent=1 // pred_region
      // Predicated region
      $region40: #{reverse.1} parent=38 // pred_check
        _
      $region41: #{reverse.1} parent=38 // pred_check_branch
        %176 = sbr.rel (0) target = $region43
      $region42: #{reverse.1} parent=38 // pred_region
        // Predicated region
        $region55: #{reverse.1} parent=42 // pred_check
          _
        $region56: #{reverse.1} parent=42 // pred_check_branch
          %205 = sbr.rel (0) target = $region58
        $region57: #{reverse.1} parent=42 // pred_region
          loop: start=0, step=1, limit=1
          $region59: #{reverse.1} parent=57 // loop_pre_header
            _
          $region60: #{reverse.1} parent=57 // loop_header
            %s207 = sphi 0, %s211
            %p208 = scmp.ge.s32.totalorder %s207, 1
            %s212 = sphi [#allocation1], [#allocation1]
            %s213 = sphi %s1, %s1
          $region61: #{reverse.1} parent=57 // loop_header_branch
            %210 = sbr.rel (%p208) target = $region65
          $region62: #{reverse.1} parent=57 // loop_body
            %v214 = vld [vmem:[%s212] sm:$0xff]
            %215 = vst [vmem:[%s213] sm:$0xff] %v214
            %v216 = vld [vmem:[%s212 + $0x8] sm:$0xff]
            %217 = vst [vmem:[%s213 + $0x8] sm:$0xff] %v216
            %v218 = vld [vmem:[%s212 + $0x10] sm:$0xff]
            %219 = vst [vmem:[%s213 + $0x10] sm:$0xff] %v218
            %v220 = vld [vmem:[%s212 + $0x18] sm:$0xff]
            %221 = vst [vmem:[%s213 + $0x18] sm:$0xff] %v220
            %v222 = vld [vmem:[%s212 + $0x20] sm:$0xff]
            %223 = vst [vmem:[%s213 + $0x20] sm:$0xff] %v222
            %v224 = vld [vmem:[%s212 + $0x28] sm:$0xff]
            %225 = vst [vmem:[%s213 + $0x28] sm:$0xff] %v224
            %v226 = vld [vmem:[%s212 + $0x30] sm:$0xff]
            %227 = vst [vmem:[%s213 + $0x30] sm:$0xff] %v226
            %v228 = vld [vmem:[%s212 + $0x38] sm:$0xff]
            %229 = vst [vmem:[%s213 + $0x38] sm:$0xff] %v228
          $region63: #{reverse.1} parent=57 // loop_footer
            %s211 = sadd.s32 1, %s207
          $region64: #{reverse.1} parent=57 // loop_footer_branch
            %206 = sbr.rel target = $region60
          $region65: #{reverse.1} parent=57 // loop_exit
            _
        $region58: #{reverse.1} parent=42 // pred_fallthru
          _
        // Predicated region
        $region66: #{reverse.1} parent=42 // pred_check
          _
        $region67: #{reverse.1} parent=42 // pred_check_branch
          %231 = sbr.rel target = $region69
        $region68: #{reverse.1} parent=42 // pred_region
          _
        $region69: #{reverse.1} parent=42 // pred_fallthru
          _
      $region43: #{reverse.1} parent=38 // pred_fallthru
        _
      // Predicated region
      $region44: #{reverse.1} parent=38 // pred_check
        _
      $region45: #{reverse.1} parent=38 // pred_check_branch
        %178 = sbr.rel target = $region47
      $region46: #{reverse.1} parent=38 // pred_region
        loop: start=0, step=1, limit=1
        $region48: #{reverse.1} parent=46 // loop_pre_header
          _
        $region49: #{reverse.1} parent=46 // loop_header
          %s181 = sphi 0, %s185
          %p182 = scmp.ge.s32.totalorder %s181, 1
          %s186 = sphi [#allocation1], [#allocation1]
          %s187 = sphi %s1, %s1
        $region50: #{reverse.1} parent=46 // loop_header_branch
          %184 = sbr.rel (%p182) target = $region54
        $region51: #{reverse.1} parent=46 // loop_body
          %v188 = vld [vmem:[%s186] sm:$0xff]
          %189 = vst [vmem:[%s187] sm:$0xff] %v188
          %v190 = vld [vmem:[%s186 + $0x8] sm:$0xff]
          %191 = vst [vmem:[%s187 + $0x8] sm:$0xff] %v190
          %v192 = vld [vmem:[%s186 + $0x10] sm:$0xff]
          %193 = vst [vmem:[%s187 + $0x10] sm:$0xff] %v192
          %v194 = vld [vmem:[%s186 + $0x18] sm:$0xff]
          %195 = vst [vmem:[%s187 + $0x18] sm:$0xff] %v194
          %v196 = vld [vmem:[%s186 + $0x20] sm:$0xff]
          %197 = vst [vmem:[%s187 + $0x20] sm:$0xff] %v196
          %v198 = vld [vmem:[%s186 + $0x28] sm:$0xff]
          %199 = vst [vmem:[%s187 + $0x28] sm:$0xff] %v198
          %v200 = vld [vmem:[%s186 + $0x30] sm:$0xff]
          %201 = vst [vmem:[%s187 + $0x30] sm:$0xff] %v200
          %v202 = vld [vmem:[%s186 + $0x38] sm:$0xff]
          %203 = vst [vmem:[%s187 + $0x38] sm:$0xff] %v202
        $region52: #{reverse.1} parent=46 // loop_footer
          %s185 = sadd.s32 1, %s181
        $region53: #{reverse.1} parent=46 // loop_footer_branch
          %180 = sbr.rel target = $region49
        $region54: #{reverse.1} parent=46 // loop_exit
          _
      $region47: #{reverse.1} parent=38 // pred_fallthru
        _
    $region39: #{reverse.1} parent=1 // pred_fallthru
      _
    %232 = vnop

// kernel: spectral_conv2d.1
$region0: #{spectral_conv2d.1}
  #allocation0 [shape = 'u32[]', space=smem, size = 0x4, offset = 0x4, fixed_abs, tag = 'smem constant byte address 0x4 - core index']
  #allocation1 [shape = 'u32[144,128]{1,0:T(1,128)}', space=vmem, size = 0x12000, scoped, tag = 'internal scratch']
  %s0 = inlined_call_operand.vmem [shape: f32[2,4,2,128], index: 0, kind: input, shape index: {}]
  %s1 = inlined_call_operand.vmem [shape: f32[2,4,4,128], index: 1, kind: input, shape index: {}]
  %s2 = inlined_call_operand.vmem [shape: f32[2,4,2,128], index: 2, kind: output, shape index: {}]
  %s3 = sld [smem:[#allocation0]]
  $region18: #{spectral_conv2d.1} parent=0
    _
  %s5 = ssub.s32 1, %s3
  %s6 = scalar_select 0, %s5, %s3
  // Predicated region
  $region2: #{spectral_conv2d.1} parent=0 // pred_check
    _
  $region3: #{spectral_conv2d.1} parent=0 // pred_check_branch
    %8 = sbr.rel (0) target = $region5
  $region4: #{spectral_conv2d.1} parent=0 // pred_region
    _
  $region5: #{spectral_conv2d.1} parent=0 // pred_fallthru
    _
  // Predicated region
  $region6: #{spectral_conv2d.1} parent=0 // pred_check
    _
  $region7: #{spectral_conv2d.1} parent=0 // pred_check_branch
    %10 = sbr.rel (0) target = $region9
  $region8: #{spectral_conv2d.1} parent=0 // pred_region
    _
  $region9: #{spectral_conv2d.1} parent=0 // pred_fallthru
    _
  %v11 = vld [vmem:[%s0] sm:$0x3]
  %s12 = scalar_lea.vmem %s0, 8
  %v13 = vld [vmem:[%s12] sm:$0x3]
  %v14 = vld [vmem:[%s1] sm:$0xf]
  %s15 = scalar_lea.vmem %s1, 16
  %v16 = vld [vmem:[%s15] sm:$0xf]
  %v17 = vadd.f32 %v11, %v13
  %v18 = vsub.f32 %v16, %v14
  %v21 = vunpack.c.l.s4 1966171168
  %v22 = vunpack.c.0.s8 %v21
  %v23 = vlaneseq
  %v24 = vshrl.u32 %v23, 7
  %v25 = vsub.s32 %v22, %v24
  %v26 = vrot.slane %v18, %v25
  %v27 = vcombine.high %v26, %v26
  %v29 = vunpack.c.l.s4 1966171168
  %v30 = vunpack.c.0.s8 %v29
  %v31 = vlaneseq
  %v32 = vshrl.u32 %v31, 7
  %v33 = vsub.s32 %v30, %v32
  %v34 = vrot.slane %v26, %v33
  %v36 = vunpack.c.l.s4 1966171168
  %v37 = vunpack.c.0.s8 %v36
  %v38 = vlaneseq
  %v39 = vshrl.u32 %v38, 7
  %v40 = vsub.s32 %v37, %v39
  %v41 = vrot.slane %v27, %v40
  %v42 = vcombine.high %v34, %v34
  %v43 = vcombine.high %v41, %v41
  %v44 = vadd.f32 %v14, %v16
  %v47 = vunpack.c.l.s4 1966171168
  %v48 = vunpack.c.0.s8 %v47
  %v49 = vlaneseq
  %v50 = vshrl.u32 %v49, 7
  %v51 = vsub.s32 %v48, %v50
  %v52 = vrot.slane %v44, %v51
  %v53 = vcombine.high %v52, %v52
  %v55 = vunpack.c.l.s4 1966171168
  %v56 = vunpack.c.0.s8 %v55
  %v57 = vlaneseq
  %v58 = vshrl.u32 %v57, 7
  %v59 = vsub.s32 %v56, %v58
  %v60 = vrot.slane %v52, %v59
  %v62 = vunpack.c.l.s4 1966171168
  %v63 = vunpack.c.0.s8 %v62
  %v64 = vlaneseq
  %v65 = vshrl.u32 %v64, 7
  %v66 = vsub.s32 %v63, %v65
  %v67 = vrot.slane %v53, %v66
  %v68 = vcombine.high %v60, %v60
  %v69 = vcombine.high %v67, %v67
  %v72 = vunpack.c.l.s4 1966171168
  %v73 = vunpack.c.0.s8 %v72
  %v74 = vlaneseq
  %v75 = vshrl.u32 %v74, 7
  %v76 = vsub.s32 %v73, %v75
  %v77 = vrot.slane %v14, %v76
  %v78 = vcombine.high %v77, %v77
  %v80 = vunpack.c.l.s4 1966171168
  %v81 = vunpack.c.0.s8 %v80
  %v82 = vlaneseq
  %v83 = vshrl.u32 %v82, 7
  %v84 = vsub.s32 %v81, %v83
  %v85 = vrot.slane %v77, %v84
  %v87 = vunpack.c.l.s4 1966171168
  %v88 = vunpack.c.0.s8 %v87
  %v89 = vlaneseq
  %v90 = vshrl.u32 %v89, 7
  %v91 = vsub.s32 %v88, %v90
  %v92 = vrot.slane %v78, %v91
  %v93 = vcombine.high %v85, %v85
  %v94 = vcombine.high %v92, %v92
  %v95 = vlaneseq
  %v96 = vshrl.u32 %v95, 7
  %v97 = vsub.s32 0, %v96
  %v98 = vrot.slane %v85, %v97
  %v99 = vlaneseq
  %v100 = vshrl.u32 %v99, 7
  %v101 = vsub.s32 0, %v100
  %v102 = vrot.slane %v92, %v101
  %v103 = vlaneseq
  %v104 = vshrl.u32 %v103, 7
  %v105 = vsub.s32 0, %v104
  %v106 = vrot.slane %v93, %v105
  %v107 = vlaneseq
  %v108 = vshrl.u32 %v107, 7
  %v109 = vsub.s32 0, %v108
  %v110 = vrot.slane %v94, %v109
  %v115 = vmul.f32 %v98, %v17
  %v116 = vmul.f32 %v102, %v17
  %v117 = vmul.f32 %v106, %v17
  %v118 = vmul.f32 %v110, %v17
  %v119 = vlaneseq
  %v120 = vshrl.u32 %v119, 7
  %v121 = vsub.s32 0, %v120
  %v122 = vrot.slane %v34, %v121
  %v123 = vlaneseq
  %v124 = vshrl.u32 %v123, 7
  %v125 = vsub.s32 0, %v124
  %v126 = vrot.slane %v41, %v125
  %v127 = vlaneseq
  %v128 = vshrl.u32 %v127, 7
  %v129 = vsub.s32 0, %v128
  %v130 = vrot.slane %v42, %v129
  %v131 = vlaneseq
  %v132 = vshrl.u32 %v131, 7
  %v133 = vsub.s32 0, %v132
  %v134 = vrot.slane %v43, %v133
  %v139 = vmul.f32 %v11, %v122
  %v140 = vmul.f32 %v11, %v126
  %v141 = vmul.f32 %v11, %v130
  %v142 = vmul.f32 %v11, %v134
  %v143 = vlaneseq
  %v144 = vshrl.u32 %v143, 7
  %v145 = vsub.s32 0, %v144
  %v146 = vrot.slane %v60, %v145
  %v147 = vlaneseq
  %v148 = vshrl.u32 %v147, 7
  %v149 = vsub.s32 0, %v148
  %v150 = vrot.slane %v67, %v149
  %v151 = vlaneseq
  %v152 = vshrl.u32 %v151, 7
  %v153 = vsub.s32 0, %v152
  %v154 = vrot.slane %v68, %v153
  %v155 = vlaneseq
  %v156 = vshrl.u32 %v155, 7
  %v157 = vsub.s32 0, %v156
  %v158 = vrot.slane %v69, %v157
  %v163 = vmul.f32 %v13, %v146
  %v164 = vmul.f32 %v13, %v150
  %v165 = vmul.f32 %v13, %v154
  %v166 = vmul.f32 %v13, %v158
  %v167 = vsub.f32 %v115, %v163
  %v168 = vsub.f32 %v116, %v164
  %v169 = vsub.f32 %v117, %v165
  %v170 = vsub.f32 %v118, %v166
  %v171 = vadd.f32 %v115, %v139
  %v172 = vadd.f32 %v116, %v140
  %v173 = vadd.f32 %v117, %v141
  %v174 = vadd.f32 %v118, %v142
  %s175 = scalar_lea.vmem %s0, 2
  %v176 = vld [vmem:[%s175] sm:$0x3]
  %s177 = scalar_lea.vmem %s0, 10
  %v178 = vld [vmem:[%s177] sm:$0x3]
  %s179 = scalar_lea.vmem %s1, 4
  %v180 = vld [vmem:[%s179] sm:$0xf]
  %s181 = scalar_lea.vmem %s1, 20
  %v182 = vld [vmem:[%s181] sm:$0xf]
  %v183 = vadd.f32 %v176, %v178
  %v184 = vsub.f32 %v182, %v180
  %v187 = vunpack.c.l.s4 1966171168
  %v188 = vunpack.c.0.s8 %v187
  %v189 = vlaneseq
  %v190 = vshrl.u32 %v189, 7
  %v191 = vsub.s32 %v188, %v190
  %v192 = vrot.slane %v184, %v191
  %v193 = vcombine.high %v192, %v192
  %v195 = vunpack.c.l.s4 1966171168
  %v196 = vunpack.c.0.s8 %v195
  %v197 = vlaneseq
  %v198 = vshrl.u32 %v197, 7
  %v199 = vsub.s32 %v196, %v198
  %v200 = vrot.slane %v192, %v199
  %v202 = vunpack.c.l.s4 1966171168
  %v203 = vunpack.c.0.s8 %v202
  %v204 = vlaneseq
  %v205 = vshrl.u32 %v204, 7
  %v206 = vsub.s32 %v203, %v205
  %v207 = vrot.slane %v193, %v206
  %v208 = vcombine.high %v200, %v200
  %v209 = vcombine.high %v207, %v207
  %v210 = vadd.f32 %v180, %v182
  %v213 = vunpack.c.l.s4 1966171168
  %v214 = vunpack.c.0.s8 %v213
  %v215 = vlaneseq
  %v216 = vshrl.u32 %v215, 7
  %v217 = vsub.s32 %v214, %v216
  %v218 = vrot.slane %v210, %v217
  %v219 = vcombine.high %v218, %v218
  %v221 = vunpack.c.l.s4 1966171168
  %v222 = vunpack.c.0.s8 %v221
  %v223 = vlaneseq
  %v224 = vshrl.u32 %v223, 7
  %v225 = vsub.s32 %v222, %v224
  %v226 = vrot.slane %v218, %v225
  %v228 = vunpack.c.l.s4 1966171168
  %v229 = vunpack.c.0.s8 %v228
  %v230 = vlaneseq
  %v231 = vshrl.u32 %v230, 7
  %v232 = vsub.s32 %v229, %v231
  %v233 = vrot.slane %v219, %v232
  %v234 = vcombine.high %v226, %v226
  %v235 = vcombine.high %v233, %v233
  %v238 = vunpack.c.l.s4 1966171168
  %v239 = vunpack.c.0.s8 %v238
  %v240 = vlaneseq
  %v241 = vshrl.u32 %v240, 7
  %v242 = vsub.s32 %v239, %v241
  %v243 = vrot.slane %v180, %v242
  %v244 = vcombine.high %v243, %v243
  %v246 = vunpack.c.l.s4 1966171168
  %v247 = vunpack.c.0.s8 %v246
  %v248 = vlaneseq
  %v249 = vshrl.u32 %v248, 7
  %v250 = vsub.s32 %v247, %v249
  %v251 = vrot.slane %v243, %v250
  %v253 = vunpack.c.l.s4 1966171168
  %v254 = vunpack.c.0.s8 %v253
  %v255 = vlaneseq
  %v256 = vshrl.u32 %v255, 7
  %v257 = vsub.s32 %v254, %v256
  %v258 = vrot.slane %v244, %v257
  %v259 = vcombine.high %v251, %v251
  %v260 = vcombine.high %v258, %v258
  %v261 = vlaneseq
  %v262 = vshrl.u32 %v261, 7
  %v263 = vsub.s32 0, %v262
  %v264 = vrot.slane %v251, %v263
  %v265 = vlaneseq
  %v266 = vshrl.u32 %v265, 7
  %v267 = vsub.s32 0, %v266
  %v268 = vrot.slane %v258, %v267
  %v269 = vlaneseq
  %v270 = vshrl.u32 %v269, 7
  %v271 = vsub.s32 0, %v270
  %v272 = vrot.slane %v259, %v271
  %v273 = vlaneseq
  %v274 = vshrl.u32 %v273, 7
  %v275 = vsub.s32 0, %v274
  %v276 = vrot.slane %v260, %v275
  %v281 = vmul.f32 %v264, %v183
  %v282 = vmul.f32 %v268, %v183
  %v283 = vmul.f32 %v272, %v183
  %v284 = vmul.f32 %v276, %v183
  %v285 = vlaneseq
  %v286 = vshrl.u32 %v285, 7
  %v287 = vsub.s32 0, %v286
  %v288 = vrot.slane %v200, %v287
  %v289 = vlaneseq
  %v290 = vshrl.u32 %v289, 7
  %v291 = vsub.s32 0, %v290
  %v292 = vrot.slane %v207, %v291
  %v293 = vlaneseq
  %v294 = vshrl.u32 %v293, 7
  %v295 = vsub.s32 0, %v294
  %v296 = vrot.slane %v208, %v295
  %v297 = vlaneseq
  %v298 = vshrl.u32 %v297, 7
  %v299 = vsub.s32 0, %v298
  %v300 = vrot.slane %v209, %v299
  %v305 = vmul.f32 %v176, %v288
  %v306 = vmul.f32 %v176, %v292
  %v307 = vmul.f32 %v176, %v296
  %v308 = vmul.f32 %v176, %v300
  %v309 = vlaneseq
  %v310 = vshrl.u32 %v309, 7
  %v311 = vsub.s32 0, %v310
  %v312 = vrot.slane %v226, %v311
  %v313 = vlaneseq
  %v314 = vshrl.u32 %v313, 7
  %v315 = vsub.s32 0, %v314
  %v316 = vrot.slane %v233, %v315
  %v317 = vlaneseq
  %v318 = vshrl.u32 %v317, 7
  %v319 = vsub.s32 0, %v318
  %v320 = vrot.slane %v234, %v319
  %v321 = vlaneseq
  %v322 = vshrl.u32 %v321, 7
  %v323 = vsub.s32 0, %v322
  %v324 = vrot.slane %v235, %v323
  %v329 = vmul.f32 %v178, %v312
  %v330 = vmul.f32 %v178, %v316
  %v331 = vmul.f32 %v178, %v320
  %v332 = vmul.f32 %v178, %v324
  %v333 = vsub.f32 %v281, %v329
  %v334 = vsub.f32 %v282, %v330
  %v335 = vsub.f32 %v283, %v331
  %v336 = vsub.f32 %v284, %v332
  %v337 = vadd.f32 %v281, %v305
  %v338 = vadd.f32 %v282, %v306
  %v339 = vadd.f32 %v283, %v307
  %v340 = vadd.f32 %v284, %v308
  %v341 = vadd.f32 %v167, %v333
  %v342 = vadd.f32 %v168, %v334
  %v343 = vadd.f32 %v169, %v335
  %v344 = vadd.f32 %v170, %v336
  %v345 = vadd.f32 %v171, %v337
  %v346 = vadd.f32 %v172, %v338
  %v347 = vadd.f32 %v173, %v339
  %v348 = vadd.f32 %v174, %v340
  %s349 = scalar_lea.vmem %s0, 4
  %v350 = vld [vmem:[%s349] sm:$0x3]
  %s351 = scalar_lea.vmem %s0, 12
  %v352 = vld [vmem:[%s351] sm:$0x3]
  %s353 = scalar_lea.vmem %s1, 8
  %v354 = vld [vmem:[%s353] sm:$0xf]
  %s355 = scalar_lea.vmem %s1, 24
  %v356 = vld [vmem:[%s355] sm:$0xf]
  %v357 = vadd.f32 %v350, %v352
  %v358 = vsub.f32 %v356, %v354
  %v361 = vunpack.c.l.s4 1966171168
  %v362 = vunpack.c.0.s8 %v361
  %v363 = vlaneseq
  %v364 = vshrl.u32 %v363, 7
  %v365 = vsub.s32 %v362, %v364
  %v366 = vrot.slane %v358, %v365
  %v367 = vcombine.high %v366, %v366
  %v369 = vunpack.c.l.s4 1966171168
  %v370 = vunpack.c.0.s8 %v369
  %v371 = vlaneseq
  %v372 = vshrl.u32 %v371, 7
  %v373 = vsub.s32 %v370, %v372
  %v374 = vrot.slane %v366, %v373
  %v376 = vunpack.c.l.s4 1966171168
  %v377 = vunpack.c.0.s8 %v376
  %v378 = vlaneseq
  %v379 = vshrl.u32 %v378, 7
  %v380 = vsub.s32 %v377, %v379
  %v381 = vrot.slane %v367, %v380
  %v382 = vcombine.high %v374, %v374
  %v383 = vcombine.high %v381, %v381
  %v384 = vadd.f32 %v354, %v356
  %v387 = vunpack.c.l.s4 1966171168
  %v388 = vunpack.c.0.s8 %v387
  %v389 = vlaneseq
  %v390 = vshrl.u32 %v389, 7
  %v391 = vsub.s32 %v388, %v390
  %v392 = vrot.slane %v384, %v391
  %v393 = vcombine.high %v392, %v392
  %v395 = vunpack.c.l.s4 1966171168
  %v396 = vunpack.c.0.s8 %v395
  %v397 = vlaneseq
  %v398 = vshrl.u32 %v397, 7
  %v399 = vsub.s32 %v396, %v398
  %v400 = vrot.slane %v392, %v399
  %v402 = vunpack.c.l.s4 1966171168
  %v403 = vunpack.c.0.s8 %v402
  %v404 = vlaneseq
  %v405 = vshrl.u32 %v404, 7
  %v406 = vsub.s32 %v403, %v405
  %v407 = vrot.slane %v393, %v406
  %v408 = vcombine.high %v400, %v400
  %v409 = vcombine.high %v407, %v407
  %v412 = vunpack.c.l.s4 1966171168
  %v413 = vunpack.c.0.s8 %v412
  %v414 = vlaneseq
  %v415 = vshrl.u32 %v414, 7
  %v416 = vsub.s32 %v413, %v415
  %v417 = vrot.slane %v354, %v416
  %v418 = vcombine.high %v417, %v417
  %v420 = vunpack.c.l.s4 1966171168
  %v421 = vunpack.c.0.s8 %v420
  %v422 = vlaneseq
  %v423 = vshrl.u32 %v422, 7
  %v424 = vsub.s32 %v421, %v423
  %v425 = vrot.slane %v417, %v424
  %v427 = vunpack.c.l.s4 1966171168
  %v428 = vunpack.c.0.s8 %v427
  %v429 = vlaneseq
  %v430 = vshrl.u32 %v429, 7
  %v431 = vsub.s32 %v428, %v430
  %v432 = vrot.slane %v418, %v431
  %v433 = vcombine.high %v425, %v425
  %v434 = vcombine.high %v432, %v432
  %v435 = vlaneseq
  %v436 = vshrl.u32 %v435, 7
  %v437 = vsub.s32 0, %v436
  %v438 = vrot.slane %v425, %v437
  %v439 = vlaneseq
  %v440 = vshrl.u32 %v439, 7
  %v441 = vsub.s32 0, %v440
  %v442 = vrot.slane %v432, %v441
  %v443 = vlaneseq
  %v444 = vshrl.u32 %v443, 7
  %v445 = vsub.s32 0, %v444
  %v446 = vrot.slane %v433, %v445
  %v447 = vlaneseq
  %v448 = vshrl.u32 %v447, 7
  %v449 = vsub.s32 0, %v448
  %v450 = vrot.slane %v434, %v449
  %v455 = vmul.f32 %v438, %v357
  %v456 = vmul.f32 %v442, %v357
  %v457 = vmul.f32 %v446, %v357
  %v458 = vmul.f32 %v450, %v357
  %v459 = vlaneseq
  %v460 = vshrl.u32 %v459, 7
  %v461 = vsub.s32 0, %v460
  %v462 = vrot.slane %v374, %v461
  %v463 = vlaneseq
  %v464 = vshrl.u32 %v463, 7
  %v465 = vsub.s32 0, %v464
  %v466 = vrot.slane %v381, %v465
  %v467 = vlaneseq
  %v468 = vshrl.u32 %v467, 7
  %v469 = vsub.s32 0, %v468
  %v470 = vrot.slane %v382, %v469
  %v471 = vlaneseq
  %v472 = vshrl.u32 %v471, 7
  %v473 = vsub.s32 0, %v472
  %v474 = vrot.slane %v383, %v473
  %v479 = vmul.f32 %v350, %v462
  %v480 = vmul.f32 %v350, %v466
  %v481 = vmul.f32 %v350, %v470
  %v482 = vmul.f32 %v350, %v474
  %v483 = vlaneseq
  %v484 = vshrl.u32 %v483, 7
  %v485 = vsub.s32 0, %v484
  %v486 = vrot.slane %v400, %v485
  %v487 = vlaneseq
  %v488 = vshrl.u32 %v487, 7
  %v489 = vsub.s32 0, %v488
  %v490 = vrot.slane %v407, %v489
  %v491 = vlaneseq
  %v492 = vshrl.u32 %v491, 7
  %v493 = vsub.s32 0, %v492
  %v494 = vrot.slane %v408, %v493
  %v495 = vlaneseq
  %v496 = vshrl.u32 %v495, 7
  %v497 = vsub.s32 0, %v496
  %v498 = vrot.slane %v409, %v497
  %v503 = vmul.f32 %v352, %v486
  %v504 = vmul.f32 %v352, %v490
  %v505 = vmul.f32 %v352, %v494
  %v506 = vmul.f32 %v352, %v498
  %v507 = vsub.f32 %v455, %v503
  %v508 = vsub.f32 %v456, %v504
  %v509 = vsub.f32 %v457, %v505
  %v510 = vsub.f32 %v458, %v506
  %v511 = vadd.f32 %v455, %v479
  %v512 = vadd.f32 %v456, %v480
  %v513 = vadd.f32 %v457, %v481
  %v514 = vadd.f32 %v458, %v482
  %v515 = vadd.f32 %v341, %v507
  %v516 = vadd.f32 %v342, %v508
  %v517 = vadd.f32 %v343, %v509
  %v518 = vadd.f32 %v344, %v510
  %v519 = vadd.f32 %v345, %v511
  %v520 = vadd.f32 %v346, %v512
  %v521 = vadd.f32 %v347, %v513
  %v522 = vadd.f32 %v348, %v514
  %s523 = scalar_lea.vmem %s0, 6
  %v524 = vld [vmem:[%s523] sm:$0x3]
  %s525 = scalar_lea.vmem %s0, 14
  %v526 = vld [vmem:[%s525] sm:$0x3]
  %s527 = scalar_lea.vmem %s1, 12
  %v528 = vld [vmem:[%s527] sm:$0xf]
  %s529 = scalar_lea.vmem %s1, 28
  %v530 = vld [vmem:[%s529] sm:$0xf]
  %v531 = vadd.f32 %v524, %v526
  %v532 = vsub.f32 %v530, %v528
  %v535 = vunpack.c.l.s4 1966171168
  %v536 = vunpack.c.0.s8 %v535
  %v537 = vlaneseq
  %v538 = vshrl.u32 %v537, 7
  %v539 = vsub.s32 %v536, %v538
  %v540 = vrot.slane %v532, %v539
  %v541 = vcombine.high %v540, %v540
  %v543 = vunpack.c.l.s4 1966171168
  %v544 = vunpack.c.0.s8 %v543
  %v545 = vlaneseq
  %v546 = vshrl.u32 %v545, 7
  %v547 = vsub.s32 %v544, %v546
  %v548 = vrot.slane %v540, %v547
  %v550 = vunpack.c.l.s4 1966171168
  %v551 = vunpack.c.0.s8 %v550
  %v552 = vlaneseq
  %v553 = vshrl.u32 %v552, 7
  %v554 = vsub.s32 %v551, %v553
  %v555 = vrot.slane %v541, %v554
  %v556 = vcombine.high %v548, %v548
  %v557 = vcombine.high %v555, %v555
  %v558 = vadd.f32 %v528, %v530
  %v561 = vunpack.c.l.s4 1966171168
  %v562 = vunpack.c.0.s8 %v561
  %v563 = vlaneseq
  %v564 = vshrl.u32 %v563, 7
  %v565 = vsub.s32 %v562, %v564
  %v566 = vrot.slane %v558, %v565
  %v567 = vcombine.high %v566, %v566
  %v569 = vunpack.c.l.s4 1966171168
  %v570 = vunpack.c.0.s8 %v569
  %v571 = vlaneseq
  %v572 = vshrl.u32 %v571, 7
  %v573 = vsub.s32 %v570, %v572
  %v574 = vrot.slane %v566, %v573
  %v576 = vunpack.c.l.s4 1966171168
  %v577 = vunpack.c.0.s8 %v576
  %v578 = vlaneseq
  %v579 = vshrl.u32 %v578, 7
  %v580 = vsub.s32 %v577, %v579
  %v581 = vrot.slane %v567, %v580
  %v582 = vcombine.high %v574, %v574
  %v583 = vcombine.high %v581, %v581
  %v586 = vunpack.c.l.s4 1966171168
  %v587 = vunpack.c.0.s8 %v586
  %v588 = vlaneseq
  %v589 = vshrl.u32 %v588, 7
  %v590 = vsub.s32 %v587, %v589
  %v591 = vrot.slane %v528, %v590
  %v592 = vcombine.high %v591, %v591
  %v594 = vunpack.c.l.s4 1966171168
  %v595 = vunpack.c.0.s8 %v594
  %v596 = vlaneseq
  %v597 = vshrl.u32 %v596, 7
  %v598 = vsub.s32 %v595, %v597
  %v599 = vrot.slane %v591, %v598
  %v601 = vunpack.c.l.s4 1966171168
  %v602 = vunpack.c.0.s8 %v601
  %v603 = vlaneseq
  %v604 = vshrl.u32 %v603, 7
  %v605 = vsub.s32 %v602, %v604
  %v606 = vrot.slane %v592, %v605
  %v607 = vcombine.high %v599, %v599
  %v608 = vcombine.high %v606, %v606
  %v609 = vlaneseq
  %v610 = vshrl.u32 %v609, 7
  %v611 = vsub.s32 0, %v610
  %v612 = vrot.slane %v599, %v611
  %v613 = vlaneseq
  %v614 = vshrl.u32 %v613, 7
  %v615 = vsub.s32 0, %v614
  %v616 = vrot.slane %v606, %v615
  %v617 = vlaneseq
  %v618 = vshrl.u32 %v617, 7
  %v619 = vsub.s32 0, %v618
  %v620 = vrot.slane %v607, %v619
  %v621 = vlaneseq
  %v622 = vshrl.u32 %v621, 7
  %v623 = vsub.s32 0, %v622
  %v624 = vrot.slane %v608, %v623
  %v629 = vmul.f32 %v612, %v531
  %v630 = vmul.f32 %v616, %v531
  %v631 = vmul.f32 %v620, %v531
  %v632 = vmul.f32 %v624, %v531
  %v633 = vlaneseq
  %v634 = vshrl.u32 %v633, 7
  %v635 = vsub.s32 0, %v634
  %v636 = vrot.slane %v548, %v635
  %v637 = vlaneseq
  %v638 = vshrl.u32 %v637, 7
  %v639 = vsub.s32 0, %v638
  %v640 = vrot.slane %v555, %v639
  %v641 = vlaneseq
  %v642 = vshrl.u32 %v641, 7
  %v643 = vsub.s32 0, %v642
  %v644 = vrot.slane %v556, %v643
  %v645 = vlaneseq
  %v646 = vshrl.u32 %v645, 7
  %v647 = vsub.s32 0, %v646
  %v648 = vrot.slane %v557, %v647
  %v653 = vmul.f32 %v524, %v636
  %v654 = vmul.f32 %v524, %v640
  %v655 = vmul.f32 %v524, %v644
  %v656 = vmul.f32 %v524, %v648
  %v657 = vlaneseq
  %v658 = vshrl.u32 %v657, 7
  %v659 = vsub.s32 0, %v658
  %v660 = vrot.slane %v574, %v659
  %v661 = vlaneseq
  %v662 = vshrl.u32 %v661, 7
  %v663 = vsub.s32 0, %v662
  %v664 = vrot.slane %v581, %v663
  %v665 = vlaneseq
  %v666 = vshrl.u32 %v665, 7
  %v667 = vsub.s32 0, %v666
  %v668 = vrot.slane %v582, %v667
  %v669 = vlaneseq
  %v670 = vshrl.u32 %v669, 7
  %v671 = vsub.s32 0, %v670
  %v672 = vrot.slane %v583, %v671
  %v677 = vmul.f32 %v526, %v660
  %v678 = vmul.f32 %v526, %v664
  %v679 = vmul.f32 %v526, %v668
  %v680 = vmul.f32 %v526, %v672
  %v681 = vsub.f32 %v629, %v677
  %v682 = vsub.f32 %v630, %v678
  %v683 = vsub.f32 %v631, %v679
  %v684 = vsub.f32 %v632, %v680
  %v685 = vadd.f32 %v629, %v653
  %v686 = vadd.f32 %v630, %v654
  %v687 = vadd.f32 %v631, %v655
  %v688 = vadd.f32 %v632, %v656
  %v689 = vadd.f32 %v515, %v681
  %v690 = vadd.f32 %v516, %v682
  %v691 = vadd.f32 %v517, %v683
  %v692 = vadd.f32 %v518, %v684
  %v693 = vadd.f32 %v519, %v685
  %v694 = vadd.f32 %v520, %v686
  %v695 = vadd.f32 %v521, %v687
  %v696 = vadd.f32 %v522, %v688
  %697 = vst [vmem:[%s2] sm:$0x3] %v689
  %698 = vst [vmem:[%s2 + $0x2] sm:$0x3] %v690
  %699 = vst [vmem:[%s2 + $0x4] sm:$0x3] %v691
  %700 = vst [vmem:[%s2 + $0x6] sm:$0x3] %v692
  %s701 = scalar_lea.vmem %s2, 8
  %702 = vst [vmem:[%s701] sm:$0x3] %v693
  %703 = vst [vmem:[%s701 + $0x2] sm:$0x3] %v694
  %704 = vst [vmem:[%s701 + $0x4] sm:$0x3] %v695
  %705 = vst [vmem:[%s701 + $0x6] sm:$0x3] %v696
  // Predicated region
  $region10: #{spectral_conv2d.1} parent=0 // pred_check
    _
  $region11: #{spectral_conv2d.1} parent=0 // pred_check_branch
    %707 = sbr.rel (0) target = $region13
  $region12: #{spectral_conv2d.1} parent=0 // pred_region
    _
  $region13: #{spectral_conv2d.1} parent=0 // pred_fallthru
    _
  // Predicated region
  $region14: #{spectral_conv2d.1} parent=0 // pred_check
    _
  $region15: #{spectral_conv2d.1} parent=0 // pred_check_branch
    %709 = sbr.rel (0) target = $region17
  $region16: #{spectral_conv2d.1} parent=0 // pred_region
    _
  $region17: #{spectral_conv2d.1} parent=0 // pred_fallthru
    _

</llo_original>
